<compile_context>
chip_gen: v6e
topology: v6e:2x2x1
jax: 0.10.0
libtpu: 0.0.40
codegen_flags: <defaults>
</compile_context>

<pallas_src>
import functools

import jax
import jax.numpy as jnp
from jax.experimental import pallas as pl
from jax.experimental.pallas import tpu as pltpu

QUANT_RANGE = 128.0          # 2 ** (num_bits - 1), num_bits = 8
ACT_EPS = 1e-5               # BitLinear.eps
CLIP_LO = -QUANT_RANGE + ACT_EPS
CLIP_HI = QUANT_RANGE - ACT_EPS
LN_EPS = 1e-5                # F.layer_norm default eps
SQRT_HALF = 0.7071067811865476


def _round_up(v, m):
    return ((v + m - 1) // m) * m


def _pad2d(a, rows, cols):
    r, c = a.shape
    if r == rows and c == cols:
        return a
    return jnp.pad(a, ((0, rows - r), (0, cols - c)))


# ------------------------------ Pallas kernel --------------------------------
def _bitlinear_kernel(dq_ref, x_ref, w_ref, b_ref, o_ref, acc_ref, *, apply_gelu):
    """Tiled (quantized_x @ binarized_W^T + bias) * dq_scale [-> GELU]."""
    k = pl.program_id(2)

    @pl.when(k == 0)
    def _():
        acc_ref[...] = jnp.zeros_like(acc_ref)

    # bf16 x bf16 -> f32 accumulation on the MXU.
    acc_ref[...] += jnp.dot(x_ref[...], w_ref[...],
                            preferred_element_type=jnp.float32)

    @pl.when(k == pl.num_programs(2) - 1)
    def _():
        out = (acc_ref[...] + b_ref[...]) * dq_ref[0]        # bias + dequantize
        if apply_gelu:
            # exact GELU (erf form), matching nn.GELU() default
            out = 0.5 * out * (1.0 + jax.lax.erf(out * SQRT_HALF))
        o_ref[...] = out.astype(o_ref.dtype)


# -------------------------- wrapper-side operand prep -------------------------
def _quantize_input(x):
    """LayerNorm over non-batch dims, clip-quantize, cast bf16. Returns (xq, gamma)."""
    axes = tuple(range(1, x.ndim))
    mu = jnp.mean(x, axis=axes, keepdims=True)
    var = jnp.mean(jnp.square(x - mu), axis=axes, keepdims=True)
    xn = (x - mu) * jax.lax.rsqrt(var + LN_EPS)
    gamma = jnp.max(jnp.abs(xn))                              # stays on device
    xq = jnp.clip(xn * (QUANT_RANGE / gamma), CLIP_LO, CLIP_HI)
    return xq.astype(jnp.bfloat16), gamma


def _binarize_weight(weight):
    """Returns (W_bin^T as bf16 with entries {-1,0,+1}, weight_abs_mean)."""
    wg = jnp.mean(jnp.abs(weight))
    w_bin = jnp.clip(jnp.round(weight / (wg + 1e-7)), -1.0, 1.0)
    return w_bin.T.astype(jnp.bfloat16), wg


def bitlinear_pallas(x, weight, bias, *, apply_gelu=False):
    """x: (B, S, D) f32.  weight: (N, D) torch layout.  bias: (N,).  -> (B, S, N) f32."""
    x = x.astype(jnp.float32)
    B, S, D = x.shape
    N = weight.shape[0]
    M = B * S

    # --- scalar / quantization glue (plain JAX, fused by XLA) -----------------
    xq, input_gamma = _quantize_input(x)
    w_t, weight_gamma = _binarize_weight(weight.astype(jnp.float32))
    dq = (input_gamma * weight_gamma / QUANT_RANGE).astype(jnp.float32).reshape(1)

    # --- MXU / lane aligned tiling (zero-padded ragged edges) -----------------
    tm = 512 if M >= 512 else _round_up(M, 8)
    tn = 512 if N >= 512 else _round_up(N, 128)
    tk = 1024 if D >= 1024 else _round_up(D, 128)
    Mp, Np, Kp = _round_up(M, tm), _round_up(N, tn), _round_up(D, tk)

    xq2d = _pad2d(xq.reshape(M, D), Mp, Kp)                        # bf16 (Mp, Kp)
    w2d = _pad2d(w_t, Kp, Np)                                      # bf16 (Kp, Np)
    b2d = _pad2d(bias.reshape(1, N).astype(jnp.float32), 1, Np)    # f32  (1, Np)

    grid = (Mp // tm, Np // tn, Kp // tk)

    out = pl.pallas_call(
        functools.partial(_bitlinear_kernel, apply_gelu=apply_gelu),
        out_shape=jax.ShapeDtypeStruct((Mp, Np), jnp.float32),
        grid_spec=pltpu.PrefetchScalarGridSpec(
            num_scalar_prefetch=0,
            grid=grid,
            in_specs=[
                pl.BlockSpec(memory_space=pltpu.MemorySpace.SMEM),   # dq scale (1,)
                pl.BlockSpec((tm, tk), lambda i, j, k: (i, k)),      # quantized x (bf16)
                pl.BlockSpec((tk, tn), lambda i, j, k: (k, j)),      # binarized W^T (bf16)
                pl.BlockSpec((1, tn), lambda i, j, k: (0, j)),       # bias (f32)
            ],
            out_specs=pl.BlockSpec((tm, tn), lambda i, j, k: (i, j)),
            scratch_shapes=[pltpu.VMEM((tm, tn), jnp.float32)],
        ),
        compiler_params=pltpu.CompilerParams(
            dimension_semantics=("parallel", "parallel", "arbitrary"),
            vmem_limit_bytes=48 * 1024 * 1024,   # tiles use ~7 MiB; fits v7x 64 MiB
        ),
    )(dq, xq2d, w2d, b2d)

    return out[:M, :N].reshape(B, S, N)


def bit_feedforward(x, params):
    """BitFeedForward: BitLinear -> GELU -> Dropout(0.0) -> BitLinear."""
    h = bitlinear_pallas(x, params["w1"], params["b1"], apply_gelu=True)
    # Dropout(p=0.0) is the identity.
    # TODO(synk): emit per-batch (sum, sumsq, max, min) side-outputs from the first
    # kernel so the layer-2 layer-norm stats / abs-max don't need an extra HBM read of h.
    return bitlinear_pallas(h, params["w2"], params["b2"], apply_gelu=False)


# ------------------------------ references -----------------------------------
def _gelu(h):
    return 0.5 * h * (1.0 + jax.lax.erf(h * SQRT_HALF))


def _bitlinear_f32(x, weight, bias):
    """Pure-f32 BitLinear forward (ground-truth semantics of the PyTorch module)."""
    axes = tuple(range(1, x.ndim))
    mu = jnp.mean(x, axis=axes, keepdims=True)
    var = jnp.mean(jnp.square(x - mu), axis=axes, keepdims=True)
    xn = (x - mu) / jnp.sqrt(var + LN_EPS)
    gamma = jnp.max(jnp.abs(xn))
    wg = jnp.mean(jnp.abs(weight))
    wb = jnp.clip(jnp.round(weight / (wg + 1e-7)), -1.0, 1.0)
    xq = jnp.clip(xn * QUANT_RANGE / gamma, CLIP_LO, CLIP_HI)
    out = jnp.einsum("bsd,nd->bsn", xq, wb,
                     precision=jax.lax.Precision.HIGHEST) + bias
    return out * gamma * wg / QUANT_RANGE


def _bitlinear_mirror(x, weight, bias):
    """Same bf16 operand prep as the Pallas wrapper; matmul done by XLA in f32."""
    xq, gamma = _quantize_input(x.astype(jnp.float32))
    w_t, wg = _binarize_weight(weight.astype(jnp.float32))
    dq = gamma * wg / QUANT_RANGE
    out = jnp.dot(xq.reshape(-1, x.shape[-1]).astype(jnp.float32),
                  w_t.astype(jnp.float32),
                  precision=jax.lax.Precision.HIGHEST) + bias
    return ((out * dq).reshape(x.shape[:-1] + (weight.shape[0],)))


def _ff_ref(x, p, bitlinear_fn):
    h = _gelu(bitlinear_fn(x, p["w1"], p["b1"]))
    return bitlinear_fn(h, p["w2"], p["b2"])


if __name__ == "__main__":
    key = jax.random.PRNGKey(0)
    kx, kw1, kb1, kw2, kb2 = jax.random.split(key, 5)

    B, S, D, MULT = 2, 8, 32, 4
    INNER = D * MULT                      # inner_dim = dim * mult
    DIM_OUT = D                           # dim_out defaults to dim

    x = jax.random.normal(kx, (B, S, D), jnp.float32)

    # Deterministic nn.Linear-style init (uniform ±1/sqrt(fan_in)).
    k1 = 1.0 / (D ** 0.5)
    k2 = 1.0 / (INNER ** 0.5)
    params = {
        "w1": jax.random.uniform(kw1, (INNER, D), jnp.float32, -k1, k1),
        "b1": jax.random.uniform(kb1, (INNER,), jnp.float32, -k1, k1),
        "w2": jax.random.uniform(kw2, (DIM_OUT, INNER), jnp.float32, -k2, k2),
        "b2": jax.random.uniform(kb2, (DIM_OUT,), jnp.float32, -k2, k2),
    }

    y = jax.block_until_ready(bit_feedforward(x, params))
    assert y.shape == (B, S, DIM_OUT)

    # (1) mechanics check: identical bf16 operand prep, matmul by XLA at HIGHEST
    #     precision — validates tiling/padding/accumulator/epilogue logic tightly.
    y_mirror = _ff_ref(x, params, _bitlinear_mirror)
    err_mirror = float(jnp.max(jnp.abs(y - y_mirror)))
    assert err_mirror < 2e-3, f"kernel vs bf16-mirror reference mismatch: {err_mirror}"

    # (2) semantics check: pure-f32 BitFeedForward reference; slack bounds the
    #     deliberate bf16 quantization of the MXU activation operand.
    y_f32 = _ff_ref(x, params, _bitlinear_f32)
    err_f32 = float(jnp.max(jnp.abs(y - y_f32)))
    assert err_f32 < 2e-2, f"kernel vs f32 reference mismatch: {err_f32}"

    print("KERNEL_OK")
</pallas_src>

<mosaic_0001>
module attributes {stable_mosaic.version = 11 : i64} {
  func.func @_bitlinear_kernel(%arg0: i32, %arg1: i32, %arg2: i32, %arg3: memref<1xf32, #tpu.memory_space<smem>>, %arg4: memref<16x128xbf16, #tpu.memory_space<vmem>>, %arg5: memref<128x128xbf16, #tpu.memory_space<vmem>>, %arg6: memref<1x128xf32, #tpu.memory_space<vmem>>, %arg7: memref<16x128xf32, #tpu.memory_space<vmem>>, %arg8: memref<16x128xf32, #tpu.memory_space<vmem>>) attributes {dimension_semantics = [#tpu.dimension_semantics<parallel>, #tpu.dimension_semantics<parallel>, #tpu.dimension_semantics<arbitrary>], iteration_bounds = array<i64: 1, 1, 1>, scalar_prefetch = 0 : i64, scratch_operands = 1 : i64, tpu.core_type = #tpu.core_type<tc>, window_params = [{transform_indices = @transform_0, window_bounds = array<i64: 1>}, {transform_indices = @transform_1, window_bounds = array<i64: 16, 128>}, {transform_indices = @transform_2, window_bounds = array<i64: 128, 128>}, {transform_indices = @transform_3, window_bounds = array<i64: 1, 128>}, {transform_indices = @transform_4, window_bounds = array<i64: 16, 128>}]} {
    %c0_i32 = arith.constant 0 : i32
    %0 = arith.cmpi eq, %arg2, %c0_i32 : i32
    %1 = arith.extui %0 : i1 to i32
    %c0_i32_0 = arith.constant 0 : i32
    %2 = arith.cmpi ne, %1, %c0_i32_0 : i32
    scf.if %2 {
      %cst_10 = arith.constant 0.000000e+00 : f32
      %12 = vector.broadcast %cst_10 : f32 to vector<16x128xf32>
      %c0_11 = arith.constant 0 : index
      %c0_12 = arith.constant 0 : index
      %13 = vector.load %arg8[%c0_11, %c0_12] : memref<16x128xf32, #tpu.memory_space<vmem>>, vector<16x128xf32>
      tpu.vector_store %arg8[%c0_11, %c0_12], %12 {strides = array<i32>} : memref<16x128xf32, #tpu.memory_space<vmem>>, vector<16x128xf32>,
    } else {
    }
    %c0 = arith.constant 0 : index
    %c0_1 = arith.constant 0 : index
    %3 = vector.load %arg8[%c0, %c0_1] : memref<16x128xf32, #tpu.memory_space<vmem>>, vector<16x128xf32>
    %c0_2 = arith.constant 0 : index
    %c0_3 = arith.constant 0 : index
    %4 = vector.load %arg4[%c0_2, %c0_3] : memref<16x128xbf16, #tpu.memory_space<vmem>>, vector<16x128xbf16>
    %c0_4 = arith.constant 0 : index
    %c0_5 = arith.constant 0 : index
    %5 = vector.load %arg5[%c0_4, %c0_5] : memref<128x128xbf16, #tpu.memory_space<vmem>>, vector<128x128xbf16>
    %cst = arith.constant dense<0.000000e+00> : vector<16x128xf32>
    %6 = tpu.matmul %4, %5, %cst {dimension_numbers = #tpu.dot_dimension_numbers<[1], [0], [0], [1], [0, 0, 1, 1], [], []>} : vector<16x128xbf16>, vector<128x128xbf16>, vector<16x128xf32> -> vector<16x128xf32>
    %7 = arith.addf %3, %6 : vector<16x128xf32>
    %c0_6 = arith.constant 0 : index
    %c0_7 = arith.constant 0 : index
    %8 = vector.load %arg8[%c0_6, %c0_7] : memref<16x128xf32, #tpu.memory_space<vmem>>, vector<16x128xf32>
    tpu.vector_store %arg8[%c0_6, %c0_7], %7 {strides = array<i32>} : memref<16x128xf32, #tpu.memory_space<vmem>>, vector<16x128xf32>,
    %c0_i32_8 = arith.constant 0 : i32
    %9 = arith.cmpi eq, %arg2, %c0_i32_8 : i32
    %10 = arith.extui %9 : i1 to i32
    %c0_i32_9 = arith.constant 0 : i32
    %11 = arith.cmpi ne, %10, %c0_i32_9 : i32
    scf.if %11 {
      %c0_10 = arith.constant 0 : index
      %c0_11 = arith.constant 0 : index
      %12 = vector.load %arg8[%c0_10, %c0_11] : memref<16x128xf32, #tpu.memory_space<vmem>>, vector<16x128xf32>
      %c0_12 = arith.constant 0 : index
      %c0_13 = arith.constant 0 : index
      %13 = vector.load %arg6[%c0_12, %c0_13] : memref<1x128xf32, #tpu.memory_space<vmem>>, vector<1x128xf32>
      %14 = vector.broadcast %13 : vector<1x128xf32> to vector<16x128xf32>
      %15 = arith.addf %12, %14 : vector<16x128xf32>
      %c0_14 = arith.constant 0 : index
      %16 = memref.load %arg3[%c0_14] : memref<1xf32, #tpu.memory_space<smem>>
      %17 = vector.broadcast %16 : f32 to vector<16x128xf32>
      %18 = arith.mulf %15, %17 : vector<16x128xf32>
      %cst_15 = arith.constant 5.000000e-01 : f32
      %19 = vector.broadcast %cst_15 : f32 to vector<16x128xf32>
      %20 = arith.mulf %19, %18 : vector<16x128xf32>
      %cst_16 = arith.constant 0.707106769 : f32
      %21 = vector.broadcast %cst_16 : f32 to vector<16x128xf32>
      %22 = arith.mulf %18, %21 : vector<16x128xf32>
      %23 = math.erf %22 : vector<16x128xf32>
      %cst_17 = arith.constant 1.000000e+00 : f32
      %24 = vector.broadcast %cst_17 : f32 to vector<16x128xf32>
      %25 = arith.addf %24, %23 : vector<16x128xf32>
      %26 = arith.mulf %20, %25 : vector<16x128xf32>
      %c0_18 = arith.constant 0 : index
      %c0_19 = arith.constant 0 : index
      %27 = vector.load %arg7[%c0_18, %c0_19] : memref<16x128xf32, #tpu.memory_space<vmem>>, vector<16x128xf32>
      tpu.vector_store %arg7[%c0_18, %c0_19], %26 {strides = array<i32>} : memref<16x128xf32, #tpu.memory_space<vmem>>, vector<16x128xf32>,
    } else {
    }
    return
  }
  func.func @transform_0(%arg0: i32, %arg1: i32, %arg2: i32) -> i32 {
    %c0_i32 = arith.constant 0 : i32
    %c0_i32_0 = arith.constant 0 : i32
    return %c0_i32 : i32
  }
  func.func @transform_1(%arg0: i32, %arg1: i32, %arg2: i32) -> (i32, i32) {
    %c0_i32 = arith.constant 0 : i32
    return %arg0, %arg2 : i32, i32
  }
  func.func @transform_2(%arg0: i32, %arg1: i32, %arg2: i32) -> (i32, i32) {
    %c0_i32 = arith.constant 0 : i32
    return %arg2, %arg1 : i32, i32
  }
  func.func @transform_3(%arg0: i32, %arg1: i32, %arg2: i32) -> (i32, i32) {
    %c0_i32 = arith.constant 0 : i32
    %c0_i32_0 = arith.constant 0 : i32
    return %c0_i32, %arg1 : i32, i32
  }
  func.func @transform_4(%arg0: i32, %arg1: i32, %arg2: i32) -> (i32, i32) {
    %c0_i32 = arith.constant 0 : i32
    return %arg0, %arg1 : i32, i32
  }
}

</mosaic_0001>

<llo_original>
// kernel: tpu_custom_call.1
$region0: #{tpu_custom_call.1}
  #allocation0 [shape = 'u32[]', space=smem, size = 0x4, offset = 0x4, fixed_abs, tag = 'smem constant byte address 0x4 - core index']
  #allocation1 [shape = 'u32[144,128]{1,0:T(1,128)}', space=vmem, size = 0x12000, scoped, tag = 'internal scratch']
  #allocation2 [shape = 'f32[16,128]{1,0:T(8,128)}', space=vmem, size = 0x2000, scoped, tag = 'scratch operand']
  #allocation3 [shape = 'f32[1]{0:T(128)S(6)}', space=smem, size = 0x200, scoped, tag = 'scoped memory for tpu_custom_call.1']
  %s0 = inlined_call_operand.<no memory space> [shape: f32[1], index: 0, kind: input, shape index: {}]
  %s1 = inlined_call_operand.hbm [shape: bf16[16,128], index: 1, kind: input, shape index: {}]
  %s2 = inlined_call_operand.hbm [shape: bf16[128,128], index: 2, kind: input, shape index: {}]
  %s3 = inlined_call_operand.vmem [shape: f32[1,128], index: 3, kind: input, shape index: {}]
  %s4 = inlined_call_operand.hbm [shape: f32[16,128], index: 4, kind: output, shape index: {}]
  %s5 = sld [smem:[#allocation0]]
  $region42: #{tpu_custom_call.1} parent=0
    _
  %s7 = ssub.s32 1, %s5
  %s8 = scalar_select 0, %s7, %s5
  %9 = sst [smem:[#allocation3]] %s0
  $region1: #{tpu_custom_call.1} parent=0
    #allocation4 [shape = 'u8[4096]{0}', space=vmem, size = 0x1000, scoped, tag = 'input window, operand 1, single buffered']
    #allocation5 [shape = 's32[1]{0}', space=sflag, size = 0x4, scoped, tag = 'scoped memory for tpu_custom_call.1']
    #allocation6 [shape = 's32[1]{0}', space=sflag, size = 0x4, scoped, tag = 'scoped memory for tpu_custom_call.1']
    #allocation7 [shape = 'u8[32768]{0}', space=vmem, size = 0x8000, scoped, tag = 'input window, operand 2, single buffered']
    #allocation8 [shape = 's32[1]{0}', space=sflag, size = 0x4, scoped, tag = 'scoped memory for tpu_custom_call.1']
    #allocation9 [shape = 'u8[8192]{0}', space=vmem, size = 0x2000, scoped, tag = 'output window, operand 0, single buffered']
    %10 = vsyncpa [#allocation5], 0
    %11 = vsyncpa [#allocation8], 0
    %12 = vsyncpa [#allocation6], 0
    // Predicated region
    $region2: #{tpu_custom_call.1} parent=1 // pred_check
      _
    $region3: #{tpu_custom_call.1} parent=1 // pred_check_branch
      %14 = sbr.rel (0) target = $region5
    $region4: #{tpu_custom_call.1} parent=1 // pred_region
      _
    $region5: #{tpu_custom_call.1} parent=1 // pred_fallthru
      _
    // Predicated region
    $region6: #{tpu_custom_call.1} parent=1 // pred_check
      _
    $region7: #{tpu_custom_call.1} parent=1 // pred_check_branch
      %16 = sbr.rel (0) target = $region9
    $region8: #{tpu_custom_call.1} parent=1 // pred_region
      %s18 = ssub.s32 128, 128
      %19 = vsyncadd [#allocation5], %s18
      %s20 = sshll.u32 [#allocation4], 4
      %s21 = int_to_ptr.vmem [resolvable:$true] %s20
      %26 = dma.hbm_to_vmem [thread:$0]  %s1, 128, %s21, [#allocation5], 64, 64, 4
    $region9: #{tpu_custom_call.1} parent=1 // pred_fallthru
      _
    // Predicated region
    $region10: #{tpu_custom_call.1} parent=1 // pred_check
      _
    $region11: #{tpu_custom_call.1} parent=1 // pred_check_branch
      %28 = sbr.rel (0) target = $region13
    $region12: #{tpu_custom_call.1} parent=1 // pred_region
      %s30 = ssub.s32 1024, 1024
      %31 = vsyncadd [#allocation8], %s30
      %s32 = sshll.u32 [#allocation7], 4
      %s33 = int_to_ptr.vmem [resolvable:$true] %s32
      %38 = dma.hbm_to_vmem [thread:$0]  %s2, 1024, %s33, [#allocation8], 64, 64, 4
    $region13: #{tpu_custom_call.1} parent=1 // pred_fallthru
      _
    // Predicated region
    $region14: #{tpu_custom_call.1} parent=1 // pred_check
      _
    $region15: #{tpu_custom_call.1} parent=1 // pred_check_branch
      %40 = sbr.rel (0) target = $region17
    $region16: #{tpu_custom_call.1} parent=1 // pred_region
      _
    $region17: #{tpu_custom_call.1} parent=1 // pred_fallthru
      _
    // Predicated region
    $region18: #{tpu_custom_call.1} parent=1 // pred_check
      _
    $region19: #{tpu_custom_call.1} parent=1 // pred_check_branch
      %42 = sbr.rel (0) target = $region21
    $region20: #{tpu_custom_call.1} parent=1 // pred_region
      %43 = dma.done [#allocation5], 128
    $region21: #{tpu_custom_call.1} parent=1 // pred_fallthru
      _
    // Predicated region
    $region22: #{tpu_custom_call.1} parent=1 // pred_check
      _
    $region23: #{tpu_custom_call.1} parent=1 // pred_check_branch
      %45 = sbr.rel (0) target = $region25
    $region24: #{tpu_custom_call.1} parent=1 // pred_region
      %46 = dma.done [#allocation8], 1024
    $region25: #{tpu_custom_call.1} parent=1 // pred_fallthru
      _
    %p48 = scmp.eq.s32.totalorder 0, 0
    // Predicated region
    $region26: #{tpu_custom_call.1} parent=1 // pred_check
      %p49 = pneg %p48
    $region27: #{tpu_custom_call.1} parent=1 // pred_check_branch
      %51 = sbr.rel (%p49) target = $region29
    $region28: #{tpu_custom_call.1} parent=1 // pred_region
      %52 = vst [vmem:[#allocation2] sm:$0xff] 0.0
      %53 = vst [vmem:[#allocation2 + $0x8] sm:$0xff] 0.0
    $region29: #{tpu_custom_call.1} parent=1 // pred_fallthru
      _
    %v54 = vld [vmem:[#allocation2] sm:$0xff]
    %v55 = vld [vmem:[#allocation2 + $0x8] sm:$0xff]
    %v56 = vld [vmem:[#allocation4] sm:$0xf]
    %v57 = vld [vmem:[#allocation4 + $0x4] sm:$0xf]
    %v58 = vld [vmem:[#allocation7] sm:$0xf]
    %v59 = vld [vmem:[#allocation7 + $0x4] sm:$0xf]
    %v60 = vld [vmem:[#allocation7 + $0x8] sm:$0xf]
    %v61 = vld [vmem:[#allocation7 + $0xc] sm:$0xf]
    %v62 = vld [vmem:[#allocation7 + $0x10] sm:$0xf]
    %v63 = vld [vmem:[#allocation7 + $0x14] sm:$0xf]
    %v64 = vld [vmem:[#allocation7 + $0x18] sm:$0xf]
    %v65 = vld [vmem:[#allocation7 + $0x1c] sm:$0xf]
    %v66 = vld [vmem:[#allocation7 + $0x20] sm:$0xf]
    %v67 = vld [vmem:[#allocation7 + $0x24] sm:$0xf]
    %v68 = vld [vmem:[#allocation7 + $0x28] sm:$0xf]
    %v69 = vld [vmem:[#allocation7 + $0x2c] sm:$0xf]
    %v70 = vld [vmem:[#allocation7 + $0x30] sm:$0xf]
    %v71 = vld [vmem:[#allocation7 + $0x34] sm:$0xf]
    %v72 = vld [vmem:[#allocation7 + $0x38] sm:$0xf]
    %v73 = vld [vmem:[#allocation7 + $0x3c] sm:$0xf]
    %v76 = vunpack.c.l.b16 %v56
    %v77 = vunpack.c.l.b16 %v57
    %v78 = vpack.c.b16 %v77, %v76
    %v96 = vunpack.c.l.b16 %v58
    %v97 = vunpack.c.l.b16 %v59
    %v98 = vunpack.c.l.b16 %v60
    %v99 = vunpack.c.l.b16 %v61
    %v100 = vunpack.c.l.b16 %v62
    %v101 = vunpack.c.l.b16 %v63
    %v102 = vunpack.c.l.b16 %v64
    %v103 = vunpack.c.l.b16 %v65
    %v104 = vunpack.c.l.b16 %v66
    %v105 = vunpack.c.l.b16 %v67
    %v106 = vunpack.c.l.b16 %v68
    %v107 = vunpack.c.l.b16 %v69
    %v108 = vunpack.c.l.b16 %v70
    %v109 = vunpack.c.l.b16 %v71
    %v110 = vunpack.c.l.b16 %v72
    %v111 = vunpack.c.l.b16 %v73
    %v112 = vpack.c.b16 %v97, %v96
    %v113 = vpack.c.b16 %v99, %v98
    %v114 = vpack.c.b16 %v101, %v100
    %v115 = vpack.c.b16 %v103, %v102
    %v116 = vpack.c.b16 %v105, %v104
    %v117 = vpack.c.b16 %v107, %v106
    %v118 = vpack.c.b16 %v109, %v108
    %v119 = vpack.c.b16 %v111, %v110
    %128 = vmatprep.subr.bf16.mxu0 0
    %129 = vmatpush1.bf16.msra.mxu0 %v119
    %130 = vmatprep.subr.bf16.mxu0 0
    %131 = vmatpush1.bf16.msra.mxu0 %v118
    %132 = vmatprep.subr.bf16.mxu0 0
    %133 = vmatpush1.bf16.msra.mxu0 %v117
    %134 = vmatprep.subr.bf16.mxu0 0
    %135 = vmatpush1.bf16.msra.mxu0 %v116
    %136 = vmatprep.subr.bf16.mxu0 0
    %137 = vmatpush1.bf16.msra.mxu0 %v115
    %138 = vmatprep.subr.bf16.mxu0 0
    %139 = vmatpush1.bf16.msra.mxu0 %v114
    %140 = vmatprep.subr.bf16.mxu0 0
    %141 = vmatpush1.bf16.msra.mxu0 %v113
    %142 = vmatprep.subr.bf16.mxu0 0
    %143 = vmatpush1.bf16.msra.mxu0 %v112
    %144 = vmatprep.subr.bf16.mxu0 0
    %145 = vmatpush2.bf16.msra.mxu0 0
    %146 = vmatprep.subr.bf16.mxu0 0
    %147 = vmatpush2.bf16.msra.mxu0 0
    %148 = vmatprep.subr.bf16.mxu0 0
    %149 = vmatpush2.bf16.msra.mxu0 0
    %150 = vmatprep.subr.bf16.mxu0 0
    %151 = vmatpush2.bf16.msra.mxu0 0
    %152 = vmatprep.subr.bf16.mxu0 0
    %153 = vmatpush2.bf16.msra.mxu0 0
    %154 = vmatprep.subr.bf16.mxu0 0
    %155 = vmatpush2.bf16.msra.mxu0 0
    %156 = vmatprep.subr.bf16.mxu0 0
    %157 = vmatpush2.bf16.msra.mxu0 0
    %158 = vmatprep.subr.bf16.mxu0 0
    %159 = vmatpush2.bf16.msra.mxu0 0
    %160 = vmatprep.mubr.bf16.mxu0 0
    %161 = vmatmul.mubr.bf16.gmra.mxu0 %v78
    %v162 = vpop.f32.mrf.mxu0
    %v163 = vadd.f32 0.0, %v162
    %v164 = vpop.f32.mrf.mxu0
    %v165 = vpop.f32.mrf.mxu0
    %v166 = vadd.f32 0.0, %v165
    %v167 = vpop.f32.mrf.mxu0
    %168 = vdwg.mxu0
    %v169 = vadd.f32 %v54, %v163
    %v170 = vadd.f32 %v55, %v166
    %171 = vst [vmem:[#allocation2] sm:$0xff] %v169
    %172 = vst [vmem:[#allocation2 + $0x8] sm:$0xff] %v170
    // Predicated region
    $region30: #{tpu_custom_call.1} parent=1 // pred_check
      %p173 = pneg %p48
    $region31: #{tpu_custom_call.1} parent=1 // pred_check_branch
      %175 = sbr.rel (%p173) target = $region33
    $region32: #{tpu_custom_call.1} parent=1 // pred_region
      %v176 = vld [vmem:[#allocation2] sm:$0xff]
      %v177 = vld [vmem:[#allocation2 + $0x8] sm:$0xff]
      %v178 = vld [vmem:[%s3] sm:$0x1]
      %v180 = vlaneseq
      %v181 = vshrl.u32 %v180, 7
      %v182 = vsub.s32 0, %v181
      %v183 = vrot.slane %v178, %v182
      %v185 = vadd.f32 %v176, %v183
      %v186 = vadd.f32 %v177, %v183
      %s187 = sld [smem:[#allocation3]]
      %v188 = vstv %s187
      %v189 = vmul.f32 %v185, %v188
      %v190 = vmul.f32 %v186, %v188
      %v191 = vmul.f32 %v189, 0.5
      %v192 = vmul.f32 %v190, 0.5
      %v193 = vmul.f32 %v189, 0.70710677
      %v194 = vmul.f32 %v190, 0.70710677
      %v195 = verf.f32.pop %v193
      %v196 = verf.f32.pop %v194
      %v197 = vadd.f32 %v195, 1.0
      %v198 = vadd.f32 %v196, 1.0
      %v199 = vmul.f32 %v191, %v197
      %v200 = vmul.f32 %v192, %v198
      %201 = vst [vmem:[#allocation9] sm:$0xff] %v199
      %202 = vst [vmem:[#allocation9 + $0x8] sm:$0xff] %v200
    $region33: #{tpu_custom_call.1} parent=1 // pred_fallthru
      _
    // Predicated region
    $region34: #{tpu_custom_call.1} parent=1 // pred_check
      _
    $region35: #{tpu_custom_call.1} parent=1 // pred_check_branch
      %204 = sbr.rel (0) target = $region37
    $region36: #{tpu_custom_call.1} parent=1 // pred_region
      %s206 = ssub.s32 256, 256
      %207 = vsyncadd [#allocation6], %s206
      %s208 = sshll.u32 [#allocation9], 4
      %s209 = int_to_ptr.vmem [resolvable:$true] %s208
      %214 = dma.vmem_to_hbm [thread:$0]  %s209, 256, %s4, [#allocation6], 128, 128, 8
    $region37: #{tpu_custom_call.1} parent=1 // pred_fallthru
      _
    // Predicated region
    $region38: #{tpu_custom_call.1} parent=1 // pred_check
      _
    $region39: #{tpu_custom_call.1} parent=1 // pred_check_branch
      %216 = sbr.rel (0) target = $region41
    $region40: #{tpu_custom_call.1} parent=1 // pred_region
      %217 = dma.done [#allocation6], 256
    $region41: #{tpu_custom_call.1} parent=1 // pred_fallthru
      _
    %218 = vsyncpa [#allocation5], 1
    %219 = vsyncpa [#allocation8], 1
    %220 = vsyncpa [#allocation6], 1

</llo_original>
